<compile_context>
chip_gen: v7x
topology: tpu7x:2x2x1
jax: 0.10.0
libtpu: 0.0.40
codegen_flags: <defaults>
</compile_context>

<pallas_src>
import functools

import jax
import jax.numpy as jnp
from jax.experimental import pallas as pl
from jax.experimental.pallas import tpu as pltpu


def _round_up(x, m):
    return (x + m - 1) // m * m


def _tpu_vmem_capacity_bytes(default=64 << 20):
    """Per-core VMEM capacity; conservative 64 MiB (v7x-sized) fallback."""
    try:
        cap = getattr(pltpu.get_tpu_info(), "vmem_capacity_bytes", None)
        if cap:
            return int(cap)
    except Exception:
        pass
    return default


def _proj_kernel(x_ref, w_ref, b_ref, o_ref):
    # x_ref: (tm, dim); w_ref: (dim, d_model); b_ref: (1, d_model) f32;
    # o_ref: (tm, d_model).  f32 accumulation on the MXU, cast only at store.
    acc = jnp.dot(x_ref[...], w_ref[...], preferred_element_type=jnp.float32)
    o_ref[...] = (acc + b_ref[...]).astype(o_ref.dtype)


def _step_vmem_bytes(tm, dim, d_model, x_bytes, out_bytes):
    """Per-step VMEM footprint (lane/sublane padded, double-buffered).

    W / b are grid-invariant (constant index_map) so the pipeline only fetches
    them once, but two buffers are still allocated; at dim = pt*pf scale they
    are KiB-sized and barely move the budget.
    """
    dim_l = _round_up(dim, 128)
    dm_l = _round_up(d_model, 128)
    x_tile = tm * dim_l * x_bytes
    o_tile = tm * dm_l * out_bytes
    w_res = _round_up(dim, 16) * dm_l * x_bytes
    b_res = 8 * dm_l * 4
    return 2 * (x_tile + o_tile + w_res + b_res)


def _linear_pallas(x2d, w, b, *, desired_tm=2048, compute_dtype=jnp.bfloat16,
                   out_dtype=jnp.float32):
    """Row-tiled linear: (M, dim) @ (dim, d_model) + b -> (M, d_model)."""
    M, dim = x2d.shape
    d_model = w.shape[1]

    x2d = x2d.astype(compute_dtype)       # no-op if the caller already cast
    w = w.astype(compute_dtype)
    b2d = b.reshape(1, d_model).astype(jnp.float32)

    x_bytes = jnp.dtype(compute_dtype).itemsize
    out_bytes = jnp.dtype(out_dtype).itemsize

    # VMEM budget / limit derived from the chip (v7x: 64 MiB/TC, v5e/v6e: 128).
    vmem_cap = _tpu_vmem_capacity_bytes()
    headroom = 8 << 20
    budget = max(12 << 20, vmem_cap // 2 - headroom)

    # Row tile: as large as the budget allows (amortizes ~0.35us/step, keeps
    # DMA on the roofline plateau), multiple of 16 rows (bf16 sublane packing).
    tm = max(16, min(_round_up(desired_tm, 16), _round_up(M, 16)))
    while tm > 16 and _step_vmem_bytes(tm, dim, d_model, x_bytes, out_bytes) > budget:
        tm -= 16
    if tm >= M:
        tm = M                            # single full block (always legal)
    else:
        steps = pl.cdiv(M, tm)
        if steps > 1 and steps % 2 == 1:
            # Prefer an even step count so v7x's two TensorCores each get the
            # same number of "parallel" steps; harmless on single-TC chips.
            tm_even = max(16, _round_up(pl.cdiv(M, steps + 1), 16))
            if tm_even < M:
                tm = tm_even

    grid = (pl.cdiv(M, tm),)              # final partial block masked by Pallas
    step_bytes = _step_vmem_bytes(tm, dim, d_model, x_bytes, out_bytes)
    vmem_limit = min(step_bytes + headroom, vmem_cap // 2 + headroom)
    vmem_limit = int(min(max(vmem_limit, 16 << 20),
                         max(vmem_cap - (4 << 20), 16 << 20)))

    out = pl.pallas_call(
        _proj_kernel,
        out_shape=jax.ShapeDtypeStruct((M, d_model), out_dtype),
        grid_spec=pltpu.PrefetchScalarGridSpec(
            num_scalar_prefetch=0,
            grid=grid,
            in_specs=[
                pl.BlockSpec((tm, dim), lambda i: (i, 0)),       # patch rows
                pl.BlockSpec((dim, d_model), lambda i: (0, 0)),  # resident W
                pl.BlockSpec((1, d_model), lambda i: (0, 0)),    # resident b
            ],
            out_specs=pl.BlockSpec((tm, d_model), lambda i: (i, 0)),
        ),
        compiler_params=pltpu.CompilerParams(
            dimension_semantics=("parallel",),
            vmem_limit_bytes=vmem_limit,
        ),
    )(x2d, w, b2d)
    return out


def patch_embed(x, w, b, pt, pf, *, desired_tm=2048,
                compute_dtype=jnp.bfloat16, out_dtype=jnp.float32):
    """Forward pass of PatchEmbed.

    x: (B, T, F) float32
    w: (pt*pf, d_model)   -- transpose of PyTorch nn.Linear.weight
    b: (d_model,)
    returns: (B, nT*nF, d_model) in out_dtype (f32 by default, like nn.Linear)
    """
    B, T, F = x.shape
    dim = pt * pf
    d_model = w.shape[1]
    T0 = (T // pt) * pt                   # silent crop — same as PyTorch module
    F0 = (F // pf) * pf
    nT, nF = T0 // pt, F0 // pf

    # Cast BEFORE the patch-extraction transpose so the single materialized
    # relayout pass (XLA copy) moves compute_dtype bytes, not f32.
    x = x[:, :T0, :F0].astype(compute_dtype)
    # Patch extraction: (B, nT, pt, nF, pf) -> (B*nT*nF, pt*pf).  Layout glue;
    # XLA emits it as one transpose-copy pass over x.
    x = x.reshape(B, nT, pt, nF, pf)
    x = jnp.transpose(x, (0, 1, 3, 2, 4)).reshape(B * nT * nF, dim)

    out2d = _linear_pallas(x, w, b, desired_tm=desired_tm,
                           compute_dtype=compute_dtype, out_dtype=out_dtype)
    return out2d.reshape(B, nT * nF, d_model)


if __name__ == "__main__":
    # Small shapes: B=2, T=16, F=16, pt=4, pf=4 -> dim=16, 16 patches, d_model=32
    B, T, F = 2, 16, 16
    pt, pf = 4, 4
    d_model = 32
    dim = pt * pf

    key = jax.random.PRNGKey(0)
    kx, kw, kb = jax.random.split(key, 3)

    x = jax.random.normal(kx, (B, T, F), dtype=jnp.float32)
    bound = 1.0 / (dim ** 0.5)            # nn.Linear default init range
    w = jax.random.uniform(kw, (dim, d_model), minval=-bound, maxval=bound,
                           dtype=jnp.float32)
    b = jax.random.uniform(kb, (d_model,), minval=-bound, maxval=bound,
                           dtype=jnp.float32)

    fwd = jax.jit(functools.partial(patch_embed, pt=pt, pf=pf))
    out = jax.block_until_ready(fwd(x, w, b))

    # Reference: same math in plain JAX, with the same bf16 input rounding the
    # kernel applies (accumulation stays f32 on both sides).
    T0, F0 = (T // pt) * pt, (F // pf) * pf
    nT, nF = T0 // pt, F0 // pf
    xr = x[:, :T0, :F0].reshape(B, nT, pt, nF, pf)
    xr = jnp.transpose(xr, (0, 1, 3, 2, 4)).reshape(B, nT * nF, dim)
    xr_bf = xr.astype(jnp.bfloat16).astype(jnp.float32)
    w_bf = w.astype(jnp.bfloat16).astype(jnp.float32)
    ref = xr_bf @ w_bf + b

    assert out.shape == (B, nT * nF, d_model)
    assert out.dtype == jnp.float32
    assert jnp.allclose(out, ref, atol=1e-4, rtol=1e-4)

    print("KERNEL_OK")
</pallas_src>

<mosaic_0001>
module attributes {stable_mosaic.version = 11 : i64} {
  func.func @_proj_kernel(%arg0: i32, %arg1: memref<32x16xbf16, #tpu.memory_space<vmem>>, %arg2: memref<16x32xbf16, #tpu.memory_space<vmem>>, %arg3: memref<1x32xf32, #tpu.memory_space<vmem>>, %arg4: memref<32x32xf32, #tpu.memory_space<vmem>>) attributes {dimension_semantics = [#tpu.dimension_semantics<parallel>], iteration_bounds = array<i64: 1>, scalar_prefetch = 0 : i64, scratch_operands = 0 : i64, tpu.core_type = #tpu.core_type<tc>, window_params = [{transform_indices = @transform_0, window_bounds = array<i64: 32, 16>}, {pipeline_mode = #tpu.pipeline_mode<synchronous>, transform_indices = @transform_1, window_bounds = array<i64: 16, 32>}, {pipeline_mode = #tpu.pipeline_mode<synchronous>, transform_indices = @transform_2, window_bounds = array<i64: 1, 32>}, {transform_indices = @transform_3, window_bounds = array<i64: 32, 32>}]} {
    %c0 = arith.constant 0 : index
    %c0_0 = arith.constant 0 : index
    %0 = vector.load %arg1[%c0, %c0_0] : memref<32x16xbf16, #tpu.memory_space<vmem>>, vector<32x16xbf16>
    %c0_1 = arith.constant 0 : index
    %c0_2 = arith.constant 0 : index
    %1 = vector.load %arg2[%c0_1, %c0_2] : memref<16x32xbf16, #tpu.memory_space<vmem>>, vector<16x32xbf16>
    %cst = arith.constant dense<0.000000e+00> : vector<32x32xf32>
    %2 = tpu.matmul %0, %1, %cst {dimension_numbers = #tpu.dot_dimension_numbers<[1], [0], [0], [1], [0, 0, 1, 1], [], []>} : vector<32x16xbf16>, vector<16x32xbf16>, vector<32x32xf32> -> vector<32x32xf32>
    %c0_3 = arith.constant 0 : index
    %c0_4 = arith.constant 0 : index
    %3 = vector.load %arg3[%c0_3, %c0_4] : memref<1x32xf32, #tpu.memory_space<vmem>>, vector<1x32xf32>
    %4 = vector.broadcast %3 : vector<1x32xf32> to vector<32x32xf32>
    %5 = arith.addf %2, %4 : vector<32x32xf32>
    %c0_5 = arith.constant 0 : index
    %c0_6 = arith.constant 0 : index
    %6 = vector.load %arg4[%c0_5, %c0_6] : memref<32x32xf32, #tpu.memory_space<vmem>>, vector<32x32xf32>
    tpu.vector_store %arg4[%c0_5, %c0_6], %5 {strides = array<i32>} : memref<32x32xf32, #tpu.memory_space<vmem>>, vector<32x32xf32>,
    return
  }
  func.func @transform_0(%arg0: i32) -> (i32, i32) {
    %c0_i32 = arith.constant 0 : i32
    %c0_i32_0 = arith.constant 0 : i32
    return %arg0, %c0_i32 : i32, i32
  }
  func.func @transform_1(%arg0: i32) -> (i32, i32) {
    %c0_i32 = arith.constant 0 : i32
    %c0_i32_0 = arith.constant 0 : i32
    %c0_i32_1 = arith.constant 0 : i32
    return %c0_i32, %c0_i32_0 : i32, i32
  }
  func.func @transform_2(%arg0: i32) -> (i32, i32) {
    %c0_i32 = arith.constant 0 : i32
    %c0_i32_0 = arith.constant 0 : i32
    %c0_i32_1 = arith.constant 0 : i32
    return %c0_i32, %c0_i32_0 : i32, i32
  }
  func.func @transform_3(%arg0: i32) -> (i32, i32) {
    %c0_i32 = arith.constant 0 : i32
    %c0_i32_0 = arith.constant 0 : i32
    return %arg0, %c0_i32 : i32, i32
  }
}

</mosaic_0001>

<llo_original>
// kernel: patch_embed.1
$region0: #{patch_embed.1}
  #allocation0 [shape = 'u32[]', space=smem, size = 0x4, offset = 0x4, fixed_abs, tag = 'smem constant byte address 0x4 - core index']
  #allocation1 [shape = 'u32[144,128]{1,0:T(1,128)}', space=vmem, size = 0x12000, scoped, tag = 'internal scratch']
  %s0 = inlined_call_operand.vmem [shape: bf16[32,16], index: 0, kind: input, shape index: {}]
  %s1 = inlined_call_operand.vmem [shape: bf16[16,32], index: 1, kind: input, shape index: {}]
  %s2 = inlined_call_operand.vmem [shape: f32[1,32], index: 2, kind: input, shape index: {}]
  %s3 = inlined_call_operand.hbm [shape: f32[32,32], index: 3, kind: output, shape index: {}]
  %s4 = sld [smem:[#allocation0]]
  $region22: #{patch_embed.1} parent=0
    _
  %s6 = ssub.s32 1, %s4
  %s7 = scalar_select 0, %s6, %s4
  $region1: #{patch_embed.1} parent=0
    #allocation2 [shape = 'u8[16384]{0}', space=vmem, size = 0x4000, scoped, tag = 'output window, operand 0, single buffered']
    #allocation3 [shape = 's32[1]{0}', space=sflag, size = 0x4, scoped, tag = 'scoped memory for patch_embed.1']
    %8 = vsyncpa [#allocation3], 0
    // Predicated region
    $region2: #{patch_embed.1} parent=1 // pred_check
      _
    $region3: #{patch_embed.1} parent=1 // pred_check_branch
      %10 = sbr.rel (0) target = $region5
    $region4: #{patch_embed.1} parent=1 // pred_region
      _
    $region5: #{patch_embed.1} parent=1 // pred_fallthru
      _
    // Predicated region
    $region6: #{patch_embed.1} parent=1 // pred_check
      _
    $region7: #{patch_embed.1} parent=1 // pred_check_branch
      %12 = sbr.rel (0) target = $region9
    $region8: #{patch_embed.1} parent=1 // pred_region
      _
    $region9: #{patch_embed.1} parent=1 // pred_fallthru
      _
    // Predicated region
    $region10: #{patch_embed.1} parent=1 // pred_check
      _
    $region11: #{patch_embed.1} parent=1 // pred_check_branch
      %14 = sbr.rel (0) target = $region13
    $region12: #{patch_embed.1} parent=1 // pred_region
      _
    $region13: #{patch_embed.1} parent=1 // pred_fallthru
      _
    %v16 = vld [vmem:[%s0] sm:$0xf]
    %v17 = vld [vmem:[%s0 + $0x4] sm:$0xf]
    %v18 = vld [vmem:[%s0 + $0x8] sm:$0xf]
    %v19 = vld [vmem:[%s0 + $0xc] sm:$0xf]
    %v20 = vld [vmem:[%s1] sm:$0xf]
    %v21 = vld [vmem:[%s1 + $0x4] sm:$0xf]
    %v22 = vld [vmem:[%s2] sm:$0x1]
    %v24 = vlaneseq
    %v25 = vshrl.u32 %v24, 7
    %v26 = vsub.s32 0, %v25
    %v27 = vrot.slane %v22, %v26
    %v33 = vunpack.c.l.b16 %v16
    %v34 = vunpack.c.l.b16 %v17
    %v35 = vunpack.c.l.b16 %v18
    %v36 = vunpack.c.l.b16 %v19
    %v37 = vpack.c.b16 %v34, %v33
    %v38 = vpack.c.b16 %v36, %v35
    %v41 = vunpack.c.l.b16 %v20
    %v42 = vunpack.c.l.b16 %v21
    %v43 = vpack.c.b16 %v42, %v41
    %vm45 = vcmask 130048
    %v47 = vsel %vm45, %v37, 0
    %v50 = vsel %vm45, %v38, 0
    %52 = vmatprep.subr.bf16.mxu0 0
    %53 = vmatpush1.bf16.msra.mxu0 %v43
    %54 = vmatprep.subr.bf16.mxu0 0
    %55 = vmatpush1.bf16.msra.mxu0 0
    %56 = vmatprep.subr.bf16.mxu0 0
    %57 = vmatpush1.bf16.msra.mxu0 0
    %58 = vmatprep.subr.bf16.mxu0 0
    %59 = vmatpush1.bf16.msra.mxu0 0
    %60 = vmatprep.subr.bf16.mxu0 0
    %61 = vmatpush1.bf16.msra.mxu0 0
    %62 = vmatprep.subr.bf16.mxu0 0
    %63 = vmatpush1.bf16.msra.mxu0 0
    %64 = vmatprep.subr.bf16.mxu0 0
    %65 = vmatpush1.bf16.msra.mxu0 0
    %66 = vmatprep.subr.bf16.mxu0 0
    %67 = vmatpush1.bf16.msra.mxu0 0
    %68 = vmatprep.subr.bf16.mxu0 0
    %69 = vmatpush1.bf16.msra.mxu0 0
    %70 = vmatprep.subr.bf16.mxu0 0
    %71 = vmatpush1.bf16.msra.mxu0 0
    %72 = vmatprep.subr.bf16.mxu0 0
    %73 = vmatpush1.bf16.msra.mxu0 0
    %74 = vmatprep.subr.bf16.mxu0 0
    %75 = vmatpush1.bf16.msra.mxu0 0
    %76 = vmatprep.subr.bf16.mxu0 0
    %77 = vmatpush1.bf16.msra.mxu0 0
    %78 = vmatprep.subr.bf16.mxu0 0
    %79 = vmatpush1.bf16.msra.mxu0 0
    %80 = vmatprep.subr.bf16.mxu0 0
    %81 = vmatpush1.bf16.msra.mxu0 0
    %82 = vmatprep.subr.bf16.mxu0 0
    %83 = vmatpush1.bf16.msra.mxu0 0
    %84 = vmatprep.mubr.bf16.mxu0 0
    %85 = vmatmul.mubr.bf16.gmra.mrb[0].mxu0 %v47
    %v86 = vpop.f32.mrb[0].mxu0
    %v87 = vadd.f32 %v27, %v86
    %v88 = vpop.f32.mrb[0].mxu0
    %v89 = vpop.f32.mrb[0].mxu0
    %v90 = vadd.f32 %v27, %v89
    %v91 = vpop.f32.mrb[0].mxu0
    %92 = vmatprep.mubr.bf16.mxu0 0
    %93 = vmatmul.mubr.bf16.gmra.mrb[0].mxu0 %v50
    %v94 = vpop.f32.mrb[0].mxu0
    %v95 = vadd.f32 %v27, %v94
    %v96 = vpop.f32.mrb[0].mxu0
    %v97 = vpop.f32.mrb[0].mxu0
    %v98 = vadd.f32 %v27, %v97
    %v99 = vpop.f32.mrb[0].mxu0
    %100 = vdwg.mxu0
    %vm101 = vcmask 261120
    %102 = vst.msk [vmem:[#allocation2] sm:$0xff] %vm101, %v87
    %103 = vst.msk [vmem:[#allocation2 + $0x8] sm:$0xff] %vm101, %v90
    %104 = vst.msk [vmem:[#allocation2 + $0x10] sm:$0xff] %vm101, %v95
    %105 = vst.msk [vmem:[#allocation2 + $0x18] sm:$0xff] %vm101, %v98
    // Predicated region
    $region14: #{patch_embed.1} parent=1 // pred_check
      _
    $region15: #{patch_embed.1} parent=1 // pred_check_branch
      %107 = sbr.rel (0) target = $region17
    $region16: #{patch_embed.1} parent=1 // pred_region
      %s109 = ssub.s32 512, 512
      %110 = vsyncadd [#allocation3], %s109
      %s111 = sshll.u32 [#allocation2], 4
      %s112 = int_to_ptr.vmem [resolvable:$true] %s111
      %117 = dma.vmem_to_hbm [thread:$0]  %s112, 512, %s3, [#allocation3], 128, 128, 8
    $region17: #{patch_embed.1} parent=1 // pred_fallthru
      _
    // Predicated region
    $region18: #{patch_embed.1} parent=1 // pred_check
      _
    $region19: #{patch_embed.1} parent=1 // pred_check_branch
      %119 = sbr.rel (0) target = $region21
    $region20: #{patch_embed.1} parent=1 // pred_region
      %120 = dma.done [#allocation3], 512
    $region21: #{patch_embed.1} parent=1 // pred_fallthru
      _
    %121 = vsyncpa [#allocation3], 1

</llo_original>
